<compile_context>
chip_gen: v7x
topology: tpu7x:2x2x1
jax: 0.10.0
libtpu: 0.0.40
codegen_flags: <defaults>
</compile_context>

<pallas_src>
import functools

import jax
import jax.numpy as jnp
from jax.experimental import pallas as pl
from jax.experimental.pallas import tpu as pltpu


def _roformer_output_kernel(x_ref, w_ref, b_ref, res_ref, g_ref, beta_ref,
                            o_ref, acc_ref, *, eps, use_layer_norm):
    # x_ref:    (tm, tk) activation row tile (stored dtype, fed directly to the MXU)
    # w_ref:    (tk, H)  dense weight tile (full weight when nk == 1)
    # b_ref:    (1,  H)  dense bias
    # res_ref:  (tm, H)  residual (input_tensor) row tile
    # g_ref:    (1,  H)  LayerNorm gamma
    # beta_ref: (1,  H)  LayerNorm beta
    # o_ref:    (tm, H)  output row tile
    # acc_ref:  (tm, H)  f32 accumulator scratch (resident across the K axis)
    k = pl.program_id(1)
    nk = pl.num_programs(1)

    @pl.when(k == 0)
    def _():
        acc_ref[...] = jnp.zeros_like(acc_ref)

    # Dense: x @ W, f32 accumulation on the MXU (bf16 operands run at native rate).
    acc_ref[...] += jnp.dot(x_ref[...], w_ref[...],
                            preferred_element_type=jnp.float32)

    @pl.when(k == nk - 1)
    def _():
        h = acc_ref[...] + b_ref[...].astype(jnp.float32)

        # Dropout is identity at inference.
        # TODO(synk): training-mode dropout (pltpu.prng_random_bits mask) not implemented.

        # Residual add in f32.
        h = h + res_ref[...].astype(jnp.float32)

        inv_h = 1.0 / h.shape[-1]  # static
        if use_layer_norm:
            # Two-pass mean/variance: avoids E[h^2] - mean^2 cancellation.
            mean = jnp.sum(h, axis=-1, keepdims=True) * inv_h
            centered = h - mean
            var = jnp.sum(centered * centered, axis=-1, keepdims=True) * inv_h
            normed = centered * jax.lax.rsqrt(var + eps)
            out = (normed * g_ref[...].astype(jnp.float32)
                   + beta_ref[...].astype(jnp.float32))
        else:
            # `Norm` variant: x / sqrt(mean(x^2) + eps), no affine params.
            var = jnp.sum(h * h, axis=-1, keepdims=True) * inv_h
            out = h * jax.lax.rsqrt(var + eps)

        o_ref[...] = out.astype(o_ref.dtype)


def roformer_output(hidden_states, input_tensor, w, b=None, gamma=None, beta=None, *,
                    eps=1e-12, norm_type="layer_norm", tm=None, tk=None):
    """Fused RoFormerOutput forward.

    hidden_states: [B, S, I]; input_tensor: [B, S, H]; w: [I, H] (in x out layout);
    b/gamma/beta: [H] (or None). Pass bf16 hidden_states/w for native MXU bf16 rate
    (accumulation stays f32); int8 (v5e/v6e) / fp8 (v7x) weights also work if the
    caller quantizes.
    """
    B, S, I = hidden_states.shape
    H = input_tensor.shape[-1]
    M = B * S
    out_dtype = hidden_states.dtype

    if b is None:
        b = jnp.zeros((H,), jnp.float32)
    if gamma is None:
        gamma = jnp.ones((H,), jnp.float32)
    if beta is None:
        beta = jnp.zeros((H,), jnp.float32)

    x_isz = jnp.dtype(hidden_states.dtype).itemsize
    res_isz = jnp.dtype(input_tensor.dtype).itemsize
    w_isz = jnp.dtype(w.dtype).itemsize
    out_isz = jnp.dtype(out_dtype).itemsize

    # --- chip-aware VMEM budget -------------------------------------------------
    try:
        vmem_cap = int(pltpu.get_tpu_info().vmem_capacity_bytes)
    except Exception:  # conservative fallback (v7x per-TC size)
        vmem_cap = 64 * 1024 * 1024
    vmem_cap_safe = int(vmem_cap * 0.85)

    # --- row tile ----------------------------------------------------------------
    if tm is None:
        tm = 512 if vmem_cap >= (100 << 20) else 256   # v5e/v6e vs v7x
    row_align = max(8, 32 // max(x_isz, 1))            # f32:8, bf16:16, 8-bit:32
    m_aligned = pl.cdiv(M, row_align) * row_align
    tm_eff = max(row_align, (min(tm, m_aligned) // row_align) * row_align)
    num_row_tiles = pl.cdiv(M, tm_eff)                  # partial last tile is masked

    # --- K split over I (only when the resident weight is too big) ---------------
    w_bytes = I * H * w_isz
    weight_budget = max(vmem_cap_safe // 3, 1 << 20)
    if tk is None:
        tk = I
        if w_bytes > weight_budget and I % 128 == 0:
            n_units = I // 128
            tk = 128  # fallback: smallest legal K tile
            for nsplit in range(2, n_units + 1):
                if n_units % nsplit == 0:
                    cand = (n_units // nsplit) * 128
                    if 2 * cand * H * w_isz <= weight_budget:
                        tk = cand
                        break
    if tk != I and (I % tk != 0 or tk % 128 != 0):
        raise ValueError(f"tk={tk} must equal I or be a multiple of 128 dividing I={I}")
    nk = 1 if tk == I else I // tk

    x2d = hidden_states.reshape(M, I)
    res2d = input_tensor.reshape(M, H)
    b2d = b.reshape(1, H)
    g2d = gamma.reshape(1, H)
    beta2d = beta.reshape(1, H)

    # --- VMEM footprint & scoped limit -------------------------------------------
    w_bufs = 1 if nk == 1 else 2
    vmem_need = (2 * tm_eff * tk * x_isz            # activation tiles (double-buffered)
                 + w_bufs * tk * H * w_isz          # weight tile(s)
                 + 2 * tm_eff * H * res_isz         # residual tiles
                 + 2 * tm_eff * H * out_isz         # output tiles
                 + tm_eff * H * 4                   # f32 accumulator scratch
                 + tm_eff * H * 4                   # epilogue f32 temporary headroom
                 + 4 * H * 4)                       # bias / gamma / beta
    vmem_limit = None
    if vmem_need > 16 * 1024 * 1024:                # v5e default scoped-VMEM ceiling
        vmem_limit = min(max(int(vmem_need * 1.3), 32 * 1024 * 1024), vmem_cap_safe)

    # --- advisory cost (includes output writes and param reads) ------------------
    rows_eff = num_row_tiles * tm_eff
    cost = pl.CostEstimate(
        flops=2 * rows_eff * I * H,
        transcendentals=rows_eff,
        bytes_accessed=(rows_eff * I * x_isz
                        + (num_row_tiles if nk > 1 else 1) * I * H * w_isz
                        + rows_eff * H * res_isz
                        + rows_eff * H * out_isz
                        + 4 * H * 4),
    )

    # --- specs --------------------------------------------------------------------
    if nk == 1:
        # Grid-invariant weight: single VMEM buffer (halves its footprint).
        w_spec = pl.BlockSpec((tk, H), lambda i, k: (0, 0),
                              pipeline_mode=pl.Buffered(1))
    else:
        w_spec = pl.BlockSpec((tk, H), lambda i, k: (k, 0))

    const_spec = lambda: pl.BlockSpec((1, H), lambda i, k: (0, 0),
                                      pipeline_mode=pl.Buffered(1))

    kernel = functools.partial(
        _roformer_output_kernel,
        eps=float(eps),
        use_layer_norm=(norm_type == "layer_norm"),
    )

    # TODO(synk): on v7x, verify the "parallel" row axis shards across both
    # TensorCores in the profile; otherwise switch to pltpu.CORE_PARALLEL.
    out2d = pl.pallas_call(
        kernel,
        out_shape=jax.ShapeDtypeStruct((M, H), out_dtype),
        grid_spec=pltpu.PrefetchScalarGridSpec(
            num_scalar_prefetch=0,
            grid=(num_row_tiles, nk),
            in_specs=[
                pl.BlockSpec((tm_eff, tk), lambda i, k: (i, k)),   # activation rows
                w_spec,                                            # weight
                const_spec(),                                      # bias
                pl.BlockSpec((tm_eff, H), lambda i, k: (i, 0)),    # residual rows
                const_spec(),                                      # gamma
                const_spec(),                                      # beta
            ],
            out_specs=pl.BlockSpec((tm_eff, H), lambda i, k: (i, 0)),
            scratch_shapes=[pltpu.VMEM((tm_eff, H), jnp.float32)],
        ),
        compiler_params=pltpu.CompilerParams(
            dimension_semantics=("parallel", "arbitrary"),
            vmem_limit_bytes=vmem_limit,
        ),
        cost_estimate=cost,
    )(x2d, w, b2d, res2d, g2d, beta2d)

    return out2d.reshape(B, S, H)


if __name__ == "__main__":
    # Small config consistent with the module's forward:
    #   intermediate_size=256, hidden_size=128, batch=2, seq=8
    B, S = 2, 8
    INTERMEDIATE, HIDDEN = 256, 128
    EPS = 1e-12

    key = jax.random.PRNGKey(0)
    k1, k2, k3, k4 = jax.random.split(key, 4)

    hidden_states = jax.random.normal(k1, (B, S, INTERMEDIATE), dtype=jnp.float32)
    input_tensor = jax.random.normal(k2, (B, S, HIDDEN), dtype=jnp.float32)

    # Deterministic parameter init (nn.Linear-style uniform; LayerNorm gamma=1, beta=0)
    bound = 1.0 / (INTERMEDIATE ** 0.5)
    w = jax.random.uniform(k3, (INTERMEDIATE, HIDDEN), minval=-bound, maxval=bound,
                           dtype=jnp.float32)
    b = jax.random.uniform(k4, (HIDDEN,), minval=-bound, maxval=bound, dtype=jnp.float32)
    gamma = jnp.ones((HIDDEN,), jnp.float32)
    beta = jnp.zeros((HIDDEN,), jnp.float32)

    def reference(hs, it):
        h = hs.reshape(-1, INTERMEDIATE) @ w + b
        h = h + it.reshape(-1, HIDDEN)
        mu = h.mean(-1, keepdims=True)
        var = ((h - mu) ** 2).mean(-1, keepdims=True)
        return ((h - mu) * jax.lax.rsqrt(var + EPS) * gamma + beta).reshape(it.shape)

    # Default path: single K step, resident weight, one row tile.
    out = roformer_output(hidden_states, input_tensor, w, b, gamma, beta, eps=EPS)
    out = jax.block_until_ready(out)
    ref = reference(hidden_states, input_tensor)
    assert jnp.allclose(out, ref, atol=1e-4, rtol=1e-4), "mismatch vs reference (default path)"

    # Stress path: M not a multiple of the row tile (masked partial last tile) and a
    # forced K split (tk=128 over I=256) exercising the accumulator / epilogue gating.
    B2, S2 = 3, 7  # M = 21
    hs2 = jax.random.normal(jax.random.PRNGKey(1), (B2, S2, INTERMEDIATE), dtype=jnp.float32)
    it2 = jax.random.normal(jax.random.PRNGKey(2), (B2, S2, HIDDEN), dtype=jnp.float32)
    out2 = roformer_output(hs2, it2, w, b, gamma, beta, eps=EPS, tm=8, tk=128)
    out2 = jax.block_until_ready(out2)
    ref2 = reference(hs2, it2)
    assert jnp.allclose(out2, ref2, atol=1e-4, rtol=1e-4), "mismatch vs reference (split path)"

    print("KERNEL_OK")
</pallas_src>

<mosaic_0001>
module attributes {stable_mosaic.version = 11 : i64} {
  func.func @_roformer_output_kernel(%arg0: i32, %arg1: i32, %arg2: memref<16x256xf32, #tpu.memory_space<vmem>>, %arg3: memref<256x128xf32, #tpu.memory_space<vmem>>, %arg4: memref<1x128xf32, #tpu.memory_space<vmem>>, %arg5: memref<16x128xf32, #tpu.memory_space<vmem>>, %arg6: memref<1x128xf32, #tpu.memory_space<vmem>>, %arg7: memref<1x128xf32, #tpu.memory_space<vmem>>, %arg8: memref<16x128xf32, #tpu.memory_space<vmem>>, %arg9: memref<16x128xf32, #tpu.memory_space<vmem>>) attributes {dimension_semantics = [#tpu.dimension_semantics<parallel>, #tpu.dimension_semantics<arbitrary>], iteration_bounds = array<i64: 1, 1>, scalar_prefetch = 0 : i64, scratch_operands = 1 : i64, tpu.core_type = #tpu.core_type<tc>, window_params = [{transform_indices = @transform_0, window_bounds = array<i64: 16, 256>}, {pipeline_mode = #tpu.pipeline_mode<synchronous>, transform_indices = @transform_1, window_bounds = array<i64: 256, 128>}, {pipeline_mode = #tpu.pipeline_mode<synchronous>, transform_indices = @transform_2, window_bounds = array<i64: 1, 128>}, {transform_indices = @transform_3, window_bounds = array<i64: 16, 128>}, {pipeline_mode = #tpu.pipeline_mode<synchronous>, transform_indices = @transform_4, window_bounds = array<i64: 1, 128>}, {pipeline_mode = #tpu.pipeline_mode<synchronous>, transform_indices = @transform_5, window_bounds = array<i64: 1, 128>}, {transform_indices = @transform_6, window_bounds = array<i64: 16, 128>}]} {
    %c0_i32 = arith.constant 0 : i32
    %0 = arith.cmpi eq, %arg1, %c0_i32 : i32
    %1 = arith.extui %0 : i1 to i32
    %c0_i32_0 = arith.constant 0 : i32
    %2 = arith.cmpi ne, %1, %c0_i32_0 : i32
    scf.if %2 {
      %cst_10 = arith.constant 0.000000e+00 : f32
      %12 = vector.broadcast %cst_10 : f32 to vector<16x128xf32>
      %c0_11 = arith.constant 0 : index
      %c0_12 = arith.constant 0 : index
      %13 = vector.load %arg9[%c0_11, %c0_12] : memref<16x128xf32, #tpu.memory_space<vmem>>, vector<16x128xf32>
      tpu.vector_store %arg9[%c0_11, %c0_12], %12 {strides = array<i32>} : memref<16x128xf32, #tpu.memory_space<vmem>>, vector<16x128xf32>,
    } else {
    }
    %c0 = arith.constant 0 : index
    %c0_1 = arith.constant 0 : index
    %3 = vector.load %arg9[%c0, %c0_1] : memref<16x128xf32, #tpu.memory_space<vmem>>, vector<16x128xf32>
    %c0_2 = arith.constant 0 : index
    %c0_3 = arith.constant 0 : index
    %4 = vector.load %arg2[%c0_2, %c0_3] : memref<16x256xf32, #tpu.memory_space<vmem>>, vector<16x256xf32>
    %c0_4 = arith.constant 0 : index
    %c0_5 = arith.constant 0 : index
    %5 = vector.load %arg3[%c0_4, %c0_5] : memref<256x128xf32, #tpu.memory_space<vmem>>, vector<256x128xf32>
    %cst = arith.constant dense<0.000000e+00> : vector<16x128xf32>
    %6 = tpu.matmul %4, %5, %cst {dimension_numbers = #tpu.dot_dimension_numbers<[1], [0], [0], [1], [0, 0, 1, 1], [], []>} : vector<16x256xf32>, vector<256x128xf32>, vector<16x128xf32> -> vector<16x128xf32>
    %7 = arith.addf %3, %6 : vector<16x128xf32>
    %c0_6 = arith.constant 0 : index
    %c0_7 = arith.constant 0 : index
    %8 = vector.load %arg9[%c0_6, %c0_7] : memref<16x128xf32, #tpu.memory_space<vmem>>, vector<16x128xf32>
    tpu.vector_store %arg9[%c0_6, %c0_7], %7 {strides = array<i32>} : memref<16x128xf32, #tpu.memory_space<vmem>>, vector<16x128xf32>,
    %c0_i32_8 = arith.constant 0 : i32
    %9 = arith.cmpi eq, %arg1, %c0_i32_8 : i32
    %10 = arith.extui %9 : i1 to i32
    %c0_i32_9 = arith.constant 0 : i32
    %11 = arith.cmpi ne, %10, %c0_i32_9 : i32
    scf.if %11 {
      %c0_10 = arith.constant 0 : index
      %c0_11 = arith.constant 0 : index
      %12 = vector.load %arg9[%c0_10, %c0_11] : memref<16x128xf32, #tpu.memory_space<vmem>>, vector<16x128xf32>
      %c0_12 = arith.constant 0 : index
      %c0_13 = arith.constant 0 : index
      %13 = vector.load %arg4[%c0_12, %c0_13] : memref<1x128xf32, #tpu.memory_space<vmem>>, vector<1x128xf32>
      %14 = vector.broadcast %13 : vector<1x128xf32> to vector<16x128xf32>
      %15 = arith.addf %12, %14 : vector<16x128xf32>
      %c0_14 = arith.constant 0 : index
      %c0_15 = arith.constant 0 : index
      %16 = vector.load %arg5[%c0_14, %c0_15] : memref<16x128xf32, #tpu.memory_space<vmem>>, vector<16x128xf32>
      %17 = arith.addf %15, %16 : vector<16x128xf32>
      %cst_16 = arith.constant dense<0.000000e+00> : vector<16xf32>
      %18 = vector.multi_reduction <add>, %17, %cst_16 [1] : vector<16x128xf32> to vector<16xf32>
      %19 = vector.shape_cast %18 : vector<16xf32> to vector<16x1xf32>
      %cst_17 = arith.constant 7.812500e-03 : f32
      %20 = vector.broadcast %cst_17 : f32 to vector<16x1xf32>
      %21 = arith.mulf %19, %20 : vector<16x1xf32>
      %22 = vector.broadcast %21 : vector<16x1xf32> to vector<16x128xf32>
      %23 = arith.subf %17, %22 : vector<16x128xf32>
      %24 = arith.mulf %23, %23 : vector<16x128xf32>
      %cst_18 = arith.constant dense<0.000000e+00> : vector<16xf32>
      %25 = vector.multi_reduction <add>, %24, %cst_18 [1] : vector<16x128xf32> to vector<16xf32>
      %26 = vector.shape_cast %25 : vector<16xf32> to vector<16x1xf32>
      %cst_19 = arith.constant 7.812500e-03 : f32
      %27 = vector.broadcast %cst_19 : f32 to vector<16x1xf32>
      %28 = arith.mulf %26, %27 : vector<16x1xf32>
      %cst_20 = arith.constant 9.99999996E-13 : f32
      %29 = vector.broadcast %cst_20 : f32 to vector<16x1xf32>
      %30 = arith.addf %28, %29 : vector<16x1xf32>
      %31 = math.rsqrt %30 : vector<16x1xf32>
      %32 = vector.broadcast %31 : vector<16x1xf32> to vector<16x128xf32>
      %33 = arith.mulf %23, %32 : vector<16x128xf32>
      %c0_21 = arith.constant 0 : index
      %c0_22 = arith.constant 0 : index
      %34 = vector.load %arg6[%c0_21, %c0_22] : memref<1x128xf32, #tpu.memory_space<vmem>>, vector<1x128xf32>
      %35 = vector.broadcast %34 : vector<1x128xf32> to vector<16x128xf32>
      %36 = arith.mulf %33, %35 : vector<16x128xf32>
      %c0_23 = arith.constant 0 : index
      %c0_24 = arith.constant 0 : index
      %37 = vector.load %arg7[%c0_23, %c0_24] : memref<1x128xf32, #tpu.memory_space<vmem>>, vector<1x128xf32>
      %38 = vector.broadcast %37 : vector<1x128xf32> to vector<16x128xf32>
      %39 = arith.addf %36, %38 : vector<16x128xf32>
      %c0_25 = arith.constant 0 : index
      %c0_26 = arith.constant 0 : index
      %40 = vector.load %arg8[%c0_25, %c0_26] : memref<16x128xf32, #tpu.memory_space<vmem>>, vector<16x128xf32>
      tpu.vector_store %arg8[%c0_25, %c0_26], %39 {strides = array<i32>} : memref<16x128xf32, #tpu.memory_space<vmem>>, vector<16x128xf32>,
    } else {
    }
    return
  }
  func.func @transform_0(%arg0: i32, %arg1: i32) -> (i32, i32) {
    %c0_i32 = arith.constant 0 : i32
    return %arg0, %arg1 : i32, i32
  }
  func.func @transform_1(%arg0: i32, %arg1: i32) -> (i32, i32) {
    %c0_i32 = arith.constant 0 : i32
    %c0_i32_0 = arith.constant 0 : i32
    %c0_i32_1 = arith.constant 0 : i32
    return %c0_i32, %c0_i32_0 : i32, i32
  }
  func.func @transform_2(%arg0: i32, %arg1: i32) -> (i32, i32) {
    %c0_i32 = arith.constant 0 : i32
    %c0_i32_0 = arith.constant 0 : i32
    %c0_i32_1 = arith.constant 0 : i32
    return %c0_i32, %c0_i32_0 : i32, i32
  }
  func.func @transform_3(%arg0: i32, %arg1: i32) -> (i32, i32) {
    %c0_i32 = arith.constant 0 : i32
    %c0_i32_0 = arith.constant 0 : i32
    return %arg0, %c0_i32 : i32, i32
  }
  func.func @transform_4(%arg0: i32, %arg1: i32) -> (i32, i32) {
    %c0_i32 = arith.constant 0 : i32
    %c0_i32_0 = arith.constant 0 : i32
    %c0_i32_1 = arith.constant 0 : i32
    return %c0_i32, %c0_i32_0 : i32, i32
  }
  func.func @transform_5(%arg0: i32, %arg1: i32) -> (i32, i32) {
    %c0_i32 = arith.constant 0 : i32
    %c0_i32_0 = arith.constant 0 : i32
    %c0_i32_1 = arith.constant 0 : i32
    return %c0_i32, %c0_i32_0 : i32, i32
  }
  func.func @transform_6(%arg0: i32, %arg1: i32) -> (i32, i32) {
    %c0_i32 = arith.constant 0 : i32
    %c0_i32_0 = arith.constant 0 : i32
    return %arg0, %c0_i32 : i32, i32
  }
}

</mosaic_0001>

<llo_original>
// kernel: tpu_custom_call.1
$region0: #{tpu_custom_call.1}
  #allocation0 [shape = 'u32[]', space=smem, size = 0x4, offset = 0x4, fixed_abs, tag = 'smem constant byte address 0x4 - core index']
  #allocation1 [shape = 'u32[144,128]{1,0:T(1,128)}', space=vmem, size = 0x12000, scoped, tag = 'internal scratch']
  #allocation2 [shape = 'f32[16,128]{1,0:T(8,128)}', space=vmem, size = 0x2000, scoped, tag = 'scratch operand']
  %s0 = inlined_call_operand.hbm [shape: f32[16,256], index: 0, kind: input, shape index: {}]
  %s1 = inlined_call_operand.hbm [shape: f32[256,128], index: 1, kind: input, shape index: {}]
  %s2 = inlined_call_operand.vmem [shape: f32[1,128], index: 2, kind: input, shape index: {}]
  %s3 = inlined_call_operand.hbm [shape: f32[16,128], index: 3, kind: input, shape index: {}]
  %s4 = inlined_call_operand.vmem [shape: f32[1,128], index: 4, kind: input, shape index: {}]
  %s5 = inlined_call_operand.vmem [shape: f32[1,128], index: 5, kind: input, shape index: {}]
  %s6 = inlined_call_operand.hbm [shape: f32[16,128], index: 6, kind: output, shape index: {}]
  %s7 = sld [smem:[#allocation0]]
  $region54: #{tpu_custom_call.1} parent=0
    _
  %s9 = ssub.s32 1, %s7
  %s10 = scalar_select 0, %s9, %s7
  $region1: #{tpu_custom_call.1} parent=0
    #allocation3 [shape = 'u8[16384]{0}', space=vmem, size = 0x4000, scoped, tag = 'input window, operand 0, single buffered']
    #allocation4 [shape = 's32[1]{0}', space=sflag, size = 0x4, scoped, tag = 'scoped memory for tpu_custom_call.1']
    #allocation5 [shape = 's32[1]{0}', space=sflag, size = 0x4, scoped, tag = 'scoped memory for tpu_custom_call.1']
    #allocation6 [shape = 'u8[131072]{0}', space=vmem, size = 0x20000, scoped, tag = 'input window, operand 1, single buffered']
    #allocation7 [shape = 's32[1]{0}', space=sflag, size = 0x4, scoped, tag = 'scoped memory for tpu_custom_call.1']
    #allocation8 [shape = 'u8[8192]{0}', space=vmem, size = 0x2000, scoped, tag = 'input window, operand 3, single buffered']
    #allocation9 [shape = 'u8[8192]{0}', space=vmem, size = 0x2000, scoped, tag = 'output window, operand 0, single buffered']
    %11 = vsyncpa [#allocation4], 0
    %12 = vsyncpa [#allocation7], 0
    %13 = vsyncpa [#allocation5], 0
    // Predicated region
    $region2: #{tpu_custom_call.1} parent=1 // pred_check
      _
    $region3: #{tpu_custom_call.1} parent=1 // pred_check_branch
      %15 = sbr.rel (0) target = $region5
    $region4: #{tpu_custom_call.1} parent=1 // pred_region
      %s17 = ssub.s32 512, 512
      %18 = vsyncadd [#allocation4], %s17
      %s19 = sshll.u32 [#allocation3], 4
      %s20 = int_to_ptr.vmem [resolvable:$true] %s19
      %25 = dma.hbm_to_vmem [thread:$0]  %s0, 512, %s20, [#allocation4], 256, 256, 16
    $region5: #{tpu_custom_call.1} parent=1 // pred_fallthru
      _
    // Predicated region
    $region6: #{tpu_custom_call.1} parent=1 // pred_check
      _
    $region7: #{tpu_custom_call.1} parent=1 // pred_check_branch
      %27 = sbr.rel (0) target = $region9
    $region8: #{tpu_custom_call.1} parent=1 // pred_region
      %s29 = ssub.s32 4096, 4096
      %30 = vsyncadd [#allocation7], %s29
      %s31 = sshll.u32 [#allocation6], 4
      %s32 = int_to_ptr.vmem [resolvable:$true] %s31
      %37 = dma.hbm_to_vmem [thread:$0]  %s1, 4096, %s32, [#allocation7], 128, 128, 8
    $region9: #{tpu_custom_call.1} parent=1 // pred_fallthru
      _
    // Predicated region
    $region10: #{tpu_custom_call.1} parent=1 // pred_check
      _
    $region11: #{tpu_custom_call.1} parent=1 // pred_check_branch
      %39 = sbr.rel (0) target = $region13
    $region12: #{tpu_custom_call.1} parent=1 // pred_region
      _
    $region13: #{tpu_custom_call.1} parent=1 // pred_fallthru
      _
    // Predicated region
    $region14: #{tpu_custom_call.1} parent=1 // pred_check
      _
    $region15: #{tpu_custom_call.1} parent=1 // pred_check_branch
      %41 = sbr.rel (0) target = $region17
    $region16: #{tpu_custom_call.1} parent=1 // pred_region
      %s43 = ssub.s32 256, 256
      %44 = vsyncadd [#allocation7], %s43
      %s45 = sshll.u32 [#allocation8], 4
      %s46 = int_to_ptr.vmem [resolvable:$true] %s45
      %51 = dma.hbm_to_vmem [thread:$0]  %s3, 256, %s46, [#allocation7], 128, 128, 8
    $region17: #{tpu_custom_call.1} parent=1 // pred_fallthru
      _
    // Predicated region
    $region18: #{tpu_custom_call.1} parent=1 // pred_check
      _
    $region19: #{tpu_custom_call.1} parent=1 // pred_check_branch
      %53 = sbr.rel (0) target = $region21
    $region20: #{tpu_custom_call.1} parent=1 // pred_region
      _
    $region21: #{tpu_custom_call.1} parent=1 // pred_fallthru
      _
    // Predicated region
    $region22: #{tpu_custom_call.1} parent=1 // pred_check
      _
    $region23: #{tpu_custom_call.1} parent=1 // pred_check_branch
      %55 = sbr.rel (0) target = $region25
    $region24: #{tpu_custom_call.1} parent=1 // pred_region
      _
    $region25: #{tpu_custom_call.1} parent=1 // pred_fallthru
      _
    // Predicated region
    $region26: #{tpu_custom_call.1} parent=1 // pred_check
      _
    $region27: #{tpu_custom_call.1} parent=1 // pred_check_branch
      %57 = sbr.rel (0) target = $region29
    $region28: #{tpu_custom_call.1} parent=1 // pred_region
      %58 = dma.done [#allocation4], 512
    $region29: #{tpu_custom_call.1} parent=1 // pred_fallthru
      _
    // Predicated region
    $region30: #{tpu_custom_call.1} parent=1 // pred_check
      _
    $region31: #{tpu_custom_call.1} parent=1 // pred_check_branch
      %60 = sbr.rel (0) target = $region33
    $region32: #{tpu_custom_call.1} parent=1 // pred_region
      %61 = dma.done [#allocation7], 4096
    $region33: #{tpu_custom_call.1} parent=1 // pred_fallthru
      _
    // Predicated region
    $region34: #{tpu_custom_call.1} parent=1 // pred_check
      _
    $region35: #{tpu_custom_call.1} parent=1 // pred_check_branch
      %63 = sbr.rel (0) target = $region37
    $region36: #{tpu_custom_call.1} parent=1 // pred_region
      %64 = dma.done [#allocation7], 256
    $region37: #{tpu_custom_call.1} parent=1 // pred_fallthru
      _
    %p65 = scmp.eq.s32.totalorder 0, 0
    // Predicated region
    $region38: #{tpu_custom_call.1} parent=1 // pred_check
      %p66 = pneg %p65
    $region39: #{tpu_custom_call.1} parent=1 // pred_check_branch
      %68 = sbr.rel (%p66) target = $region41
    $region40: #{tpu_custom_call.1} parent=1 // pred_region
      %69 = vst [vmem:[#allocation2] sm:$0xff] 0.0
      %70 = vst [vmem:[#allocation2 + $0x8] sm:$0xff] 0.0
    $region41: #{tpu_custom_call.1} parent=1 // pred_fallthru
      _
    %v71 = vld [vmem:[#allocation2] sm:$0xff]
    %v72 = vld [vmem:[#allocation2 + $0x8] sm:$0xff]
    %v73 = vld [vmem:[#allocation3] sm:$0xff]
    %v74 = vld [vmem:[#allocation3 + $0x8] sm:$0xff]
    %v75 = vld [vmem:[#allocation3 + $0x10] sm:$0xff]
    %v76 = vld [vmem:[#allocation3 + $0x18] sm:$0xff]
    %v77 = vld [vmem:[#allocation6] sm:$0xff]
    %v78 = vld [vmem:[#allocation6 + $0x8] sm:$0xff]
    %v79 = vld [vmem:[#allocation6 + $0x10] sm:$0xff]
    %v80 = vld [vmem:[#allocation6 + $0x18] sm:$0xff]
    %v81 = vld [vmem:[#allocation6 + $0x20] sm:$0xff]
    %v82 = vld [vmem:[#allocation6 + $0x28] sm:$0xff]
    %v83 = vld [vmem:[#allocation6 + $0x30] sm:$0xff]
    %v84 = vld [vmem:[#allocation6 + $0x38] sm:$0xff]
    %v85 = vld [vmem:[#allocation6 + $0x40] sm:$0xff]
    %v86 = vld [vmem:[#allocation6 + $0x48] sm:$0xff]
    %v87 = vld [vmem:[#allocation6 + $0x50] sm:$0xff]
    %v88 = vld [vmem:[#allocation6 + $0x58] sm:$0xff]
    %v89 = vld [vmem:[#allocation6 + $0x60] sm:$0xff]
    %v90 = vld [vmem:[#allocation6 + $0x68] sm:$0xff]
    %v91 = vld [vmem:[#allocation6 + $0x70] sm:$0xff]
    %v92 = vld [vmem:[#allocation6 + $0x78] sm:$0xff]
    %v93 = vld [vmem:[#allocation6 + $0x80] sm:$0xff]
    %v94 = vld [vmem:[#allocation6 + $0x88] sm:$0xff]
    %v95 = vld [vmem:[#allocation6 + $0x90] sm:$0xff]
    %v96 = vld [vmem:[#allocation6 + $0x98] sm:$0xff]
    %v97 = vld [vmem:[#allocation6 + $0xa0] sm:$0xff]
    %v98 = vld [vmem:[#allocation6 + $0xa8] sm:$0xff]
    %v99 = vld [vmem:[#allocation6 + $0xb0] sm:$0xff]
    %v100 = vld [vmem:[#allocation6 + $0xb8] sm:$0xff]
    %v101 = vld [vmem:[#allocation6 + $0xc0] sm:$0xff]
    %v102 = vld [vmem:[#allocation6 + $0xc8] sm:$0xff]
    %v103 = vld [vmem:[#allocation6 + $0xd0] sm:$0xff]
    %v104 = vld [vmem:[#allocation6 + $0xd8] sm:$0xff]
    %v105 = vld [vmem:[#allocation6 + $0xe0] sm:$0xff]
    %v106 = vld [vmem:[#allocation6 + $0xe8] sm:$0xff]
    %v107 = vld [vmem:[#allocation6 + $0xf0] sm:$0xff]
    %v108 = vld [vmem:[#allocation6 + $0xf8] sm:$0xff]
    %109 = vmatprep.subr.mxu0 0.0
    %110 = vmatpush1.msra.mxu0 %v77
    %111 = vmatprep.subr.mxu0 0.0
    %112 = vmatpush1.msra.mxu0 %v78
    %113 = vmatprep.subr.mxu0 0.0
    %114 = vmatpush1.msra.mxu0 %v79
    %115 = vmatprep.subr.mxu0 0.0
    %116 = vmatpush1.msra.mxu0 %v80
    %117 = vmatprep.subr.mxu0 0.0
    %118 = vmatpush1.msra.mxu0 %v81
    %119 = vmatprep.subr.mxu0 0.0
    %120 = vmatpush1.msra.mxu0 %v82
    %121 = vmatprep.subr.mxu0 0.0
    %122 = vmatpush1.msra.mxu0 %v83
    %123 = vmatprep.subr.mxu0 0.0
    %124 = vmatpush1.msra.mxu0 %v84
    %125 = vmatprep.subr.mxu0 0.0
    %126 = vmatpush1.msra.mxu0 %v85
    %127 = vmatprep.subr.mxu0 0.0
    %128 = vmatpush1.msra.mxu0 %v86
    %129 = vmatprep.subr.mxu0 0.0
    %130 = vmatpush1.msra.mxu0 %v87
    %131 = vmatprep.subr.mxu0 0.0
    %132 = vmatpush1.msra.mxu0 %v88
    %133 = vmatprep.subr.mxu0 0.0
    %134 = vmatpush1.msra.mxu0 %v89
    %135 = vmatprep.subr.mxu0 0.0
    %136 = vmatpush1.msra.mxu0 %v90
    %137 = vmatprep.subr.mxu0 0.0
    %138 = vmatpush1.msra.mxu0 %v91
    %139 = vmatprep.subr.mxu0 0.0
    %140 = vmatpush1.msra.mxu0 %v92
    %141 = vmatprep.subr.mxu0 0.0
    %142 = vmatpush1.msra.mxu0 %v93
    %143 = vmatprep.subr.mxu0 0.0
    %144 = vmatpush1.msra.mxu0 %v94
    %145 = vmatprep.subr.mxu0 0.0
    %146 = vmatpush1.msra.mxu0 %v95
    %147 = vmatprep.subr.mxu0 0.0
    %148 = vmatpush1.msra.mxu0 %v96
    %149 = vmatprep.subr.mxu0 0.0
    %150 = vmatpush1.msra.mxu0 %v97
    %151 = vmatprep.subr.mxu0 0.0
    %152 = vmatpush1.msra.mxu0 %v98
    %153 = vmatprep.subr.mxu0 0.0
    %154 = vmatpush1.msra.mxu0 %v99
    %155 = vmatprep.subr.mxu0 0.0
    %156 = vmatpush1.msra.mxu0 %v100
    %157 = vmatprep.subr.mxu0 0.0
    %158 = vmatpush1.msra.mxu0 %v101
    %159 = vmatprep.subr.mxu0 0.0
    %160 = vmatpush1.msra.mxu0 %v102
    %161 = vmatprep.subr.mxu0 0.0
    %162 = vmatpush1.msra.mxu0 %v103
    %163 = vmatprep.subr.mxu0 0.0
    %164 = vmatpush1.msra.mxu0 %v104
    %165 = vmatprep.subr.mxu0 0.0
    %166 = vmatpush1.msra.mxu0 %v105
    %167 = vmatprep.subr.mxu0 0.0
    %168 = vmatpush1.msra.mxu0 %v106
    %169 = vmatprep.subr.mxu0 0.0
    %170 = vmatpush1.msra.mxu0 %v107
    %171 = vmatprep.subr.mxu0 0.0
    %172 = vmatpush1.msra.mxu0 %v108
    %173 = vmatprep.mubr.f32.mxu0 %v74
    %174 = vmatmul.mubr.f32.gmra.mrb[0].mxu0 %v73
    %v175 = vpop.f32.mrb[0].mxu0
    %v176 = vadd.f32 0.0, %v175
    %v177 = vpop.f32.mrb[0].mxu0
    %178 = vmatprep.mubr.f32.mxu0 %v76
    %179 = vmatmul.mubr.f32.gmra.mrb[0].mxu0 %v75
    %v180 = vpop.f32.mrb[0].mxu0
    %v181 = vadd.f32 0.0, %v180
    %v182 = vpop.f32.mrb[0].mxu0
    %183 = vdwg.mxu0
    %v184 = vadd.f32 %v71, %v176
    %v185 = vadd.f32 %v72, %v181
    %186 = vst [vmem:[#allocation2] sm:$0xff] %v184
    %187 = vst [vmem:[#allocation2 + $0x8] sm:$0xff] %v185
    // Predicated region
    $region42: #{tpu_custom_call.1} parent=1 // pred_check
      %p188 = pneg %p65
    $region43: #{tpu_custom_call.1} parent=1 // pred_check_branch
      %190 = sbr.rel (%p188) target = $region45
    $region44: #{tpu_custom_call.1} parent=1 // pred_region
      %v191 = vld [vmem:[#allocation2] sm:$0xff]
      %v192 = vld [vmem:[#allocation2 + $0x8] sm:$0xff]
      %v193 = vld [vmem:[%s2] sm:$0x1]
      %v195 = vlaneseq
      %v196 = vshrl.u32 %v195, 7
      %v197 = vsub.s32 0, %v196
      %v198 = vrot.slane %v193, %v197
      %v200 = vadd.f32 %v191, %v198
      %v201 = vadd.f32 %v192, %v198
      %v202 = vld [vmem:[#allocation8] sm:$0xff]
      %v203 = vld [vmem:[#allocation8 + $0x8] sm:$0xff]
      %v204 = vadd.f32 %v200, %v202
      %v205 = vadd.f32 %v201, %v203
      %206 = vadd.xlane.f32.xlu0 %v204
      %v207 = vpop.xlane.xlu0 %206
      %208 = vadd.xlane.f32.xlu0 %v205
      %v209 = vpop.xlane.xlu0 %208
      %v210 = vmul.f32 %v207, 0.0078125
      %v211 = vmul.f32 %v209, 0.0078125
      %v212 = vsub.f32 %v204, %v210
      %v213 = vsub.f32 %v205, %v211
      %v214 = vmul.f32 %v212, %v212
      %v215 = vmul.f32 %v213, %v213
      %216 = vadd.xlane.f32.xlu0 %v214
      %v217 = vpop.xlane.xlu0 %216
      %218 = vadd.xlane.f32.xlu0 %v215
      %v219 = vpop.xlane.xlu0 %218
      %v220 = vmul.f32 %v217, 0.0078125
      %v221 = vmul.f32 %v219, 0.0078125
      %v222 = vadd.f32 %v220, 1e-12
      %v223 = vadd.f32 %v221, 1e-12
      %v224 = vrsqrt.pop %v222
      %v225 = vrsqrt.pop %v223
      %v226 = vmul.f32 %v212, %v224
      %v227 = vmul.f32 %v213, %v225
      %v228 = vld [vmem:[%s4] sm:$0x1]
      %v230 = vlaneseq
      %v231 = vshrl.u32 %v230, 7
      %v232 = vsub.s32 0, %v231
      %v233 = vrot.slane %v228, %v232
      %v235 = vmul.f32 %v226, %v233
      %v236 = vmul.f32 %v227, %v233
      %v237 = vld [vmem:[%s5] sm:$0x1]
      %v239 = vlaneseq
      %v240 = vshrl.u32 %v239, 7
      %v241 = vsub.s32 0, %v240
      %v242 = vrot.slane %v237, %v241
      %v244 = vadd.f32 %v235, %v242
      %v245 = vadd.f32 %v236, %v242
      %246 = vst [vmem:[#allocation9] sm:$0xff] %v244
      %247 = vst [vmem:[#allocation9 + $0x8] sm:$0xff] %v245
    $region45: #{tpu_custom_call.1} parent=1 // pred_fallthru
      _
    // Predicated region
    $region46: #{tpu_custom_call.1} parent=1 // pred_check
      _
    $region47: #{tpu_custom_call.1} parent=1 // pred_check_branch
      %249 = sbr.rel (0) target = $region49
    $region48: #{tpu_custom_call.1} parent=1 // pred_region
      %s251 = ssub.s32 256, 256
      %252 = vsyncadd [#allocation5], %s251
      %s253 = sshll.u32 [#allocation9], 4
      %s254 = int_to_ptr.vmem [resolvable:$true] %s253
      %259 = dma.vmem_to_hbm [thread:$0]  %s254, 256, %s6, [#allocation5], 128, 128, 8
    $region49: #{tpu_custom_call.1} parent=1 // pred_fallthru
      _
    // Predicated region
    $region50: #{tpu_custom_call.1} parent=1 // pred_check
      _
    $region51: #{tpu_custom_call.1} parent=1 // pred_check_branch
      %261 = sbr.rel (0) target = $region53
    $region52: #{tpu_custom_call.1} parent=1 // pred_region
      %262 = dma.done [#allocation5], 256
    $region53: #{tpu_custom_call.1} parent=1 // pred_fallthru
      _
    %263 = vsyncpa [#allocation4], 1
    %264 = vsyncpa [#allocation7], 1
    %265 = vsyncpa [#allocation5], 1

</llo_original>
